<compile_context>
chip_gen: v7x
topology: tpu7x:2x2x1
jax: 0.10.0
libtpu: 0.0.40
codegen_flags: <defaults>
</compile_context>

<pallas_src>
import functools

import numpy as np
import jax
import jax.numpy as jnp
from jax.experimental import pallas as pl
from jax.experimental.pallas import tpu as pltpu


# ---------------------------------------------------------------------------
# Exact adaptive_avg_pool2d((7,7)) as a static (H*W, 49) averaging matrix.
# PyTorch window along an axis of size S for output index i: [floor(i*S/7), ceil((i+1)*S/7)).
# ---------------------------------------------------------------------------
def adaptive_pool_matrix(H, W, out_h=7, out_w=7):
    def axis_mat(size, out):
        m = np.zeros((size, out), np.float32)
        for i in range(out):
            s = (i * size) // out
            e = -(-((i + 1) * size) // out)      # ceil
            m[s:e, i] = 1.0 / (e - s)
        return m

    ph = axis_mat(H, out_h)                      # (H, 7)
    pw = axis_mat(W, out_w)                      # (W, 7)
    P = np.einsum("hi,wj->hwij", ph, pw).reshape(H * W, out_h * out_w)
    return P.astype(np.float32)                  # row = y*W + x, col = i*7 + j


# ---------------------------------------------------------------------------
# pltpu.roll direction probe (one tiny kernel at init, not on the hot path).
# ---------------------------------------------------------------------------
def _roll_probe_kernel(x_ref, o_ref):
    o_ref[...] = pltpu.roll(x_ref[...], shift=1, axis=1)


def _roll_matches_jnp():
    x = jnp.tile(jnp.arange(128, dtype=jnp.int32)[None, :], (8, 1))
    r = pl.pallas_call(
        _roll_probe_kernel,
        out_shape=jax.ShapeDtypeStruct((8, 128), jnp.int32),
    )(x)
    return int(r[0, 0]) == 127                   # jnp.roll semantics: out[0] == in[-1]


# ---------------------------------------------------------------------------
# Fused forward kernel: B_TILE images per grid step, batch packed on the lane axis.
# Activations are channel-major: (C, B_TILE*H*W).
# ---------------------------------------------------------------------------
def _fused_cnn_kernel(x_ref, w1_ref, b1_ref, w2_ref, b2_ref, p_ref,
                      wfc1_ref, bfc1_ref, wfc2_ref, bfc2_ref, o_ref,
                      *, H, W, b_tile, roll_like_jnp):
    HW = H * W
    L = b_tile * HW

    # Coordinates of each lane within *its own image* -> per-image exact boundary masks
    # (also mask out roll wrap-around across image boundaries).
    lane = jax.lax.broadcasted_iota(jnp.int32, (1, L), 1)
    q = lane % HW
    yy = q // W
    xx = q % W

    # Hoisted tap masks (shared by both conv layers), bf16 for cheap VPU multiplies.
    tap_masks = []
    for tap in range(9):
        dy, dx = tap // 3 - 1, tap % 3 - 1
        valid = ((yy + dy >= 0) & (yy + dy < H) & (xx + dx >= 0) & (xx + dx < W))
        tap_masks.append(valid.astype(jnp.bfloat16))             # (1, L)

    def conv3x3_relu(act_bf16, w_ref, b_ref):
        # Stack the 9 shifted+masked copies along the contraction axis -> ONE MXU matmul.
        taps = []
        for tap in range(9):
            dy, dx = tap // 3 - 1, tap % 3 - 1
            s = dy * W + dx                                      # flattened source offset
            if s == 0:
                shifted = act_bf16
            else:
                shift = ((-s) if roll_like_jnp else s) % L
                shifted = pltpu.roll(act_bf16, shift=shift, axis=1)
            taps.append(shifted * tap_masks[tap])                # zero-padding boundary
        stacked = jnp.concatenate(taps, axis=0)                  # (9*Cin, L) bf16
        acc = jnp.dot(w_ref[...], stacked,                       # (Cout,9*Cin)@(9*Cin,L)
                      preferred_element_type=jnp.float32)
        return jnp.maximum(acc + b_ref[...], 0.0)                # bias + ReLU in f32

    x = x_ref[...]                                               # (Cin, L) bf16
    act1 = conv3x3_relu(x, w1_ref, b1_ref).astype(jnp.bfloat16)      # (16, L)
    act2 = conv3x3_relu(act1, w2_ref, b2_ref).astype(jnp.bfloat16)   # (32, L)

    # Exact adaptive average pool, per image: (32, HW)bf16 @ (HW, 49)bf16 -> f32.
    pool = p_ref[...]
    pooled = []                                                  # b_tile x (32, 49) f32
    for b in range(b_tile):
        pooled.append(jnp.dot(act2[:, b * HW:(b + 1) * HW], pool,
                              preferred_element_type=jnp.float32))

    # fc1, amortized across the batch tile: for each channel c, gather its pooled row
    # from every image into a (b_tile, 49) LHS and accumulate one (b_tile,49)@(49,256)
    # matmul (32 MXU issues per grid step instead of 32 per image).
    c2 = wfc1_ref.shape[0]
    nh = bfc1_ref.shape[1]
    h = jnp.zeros((b_tile, nh), jnp.float32)
    for c in range(c2):
        rows = [pooled[b][c:c + 1, :] for b in range(b_tile)]    # sublane slices
        lhs_c = rows[0] if b_tile == 1 else jnp.concatenate(rows, axis=0)
        h = h + jnp.dot(lhs_c.astype(jnp.bfloat16), wfc1_ref[c],  # (49, 256) bf16
                        preferred_element_type=jnp.float32)
    h = jnp.maximum(h + bfc1_ref[...], 0.0).astype(jnp.bfloat16)  # (b_tile, 256)

    out = jnp.dot(h, wfc2_ref[...],                               # (256, 128) bf16, padded
                  preferred_element_type=jnp.float32) + bfc2_ref[...]
    o_ref[0] = out.astype(o_ref.dtype)                            # lane-dense (b_tile, 128)


# ---------------------------------------------------------------------------
# Wrapper: single pallas_call for the whole network, grid over batch tiles.
# ---------------------------------------------------------------------------
def cnn_forward(x_nchw, kp, action_dim, *, b_tile=8, roll_like_jnp=True):
    N, Cin, H, W = x_nchw.shape
    HW = H * W
    assert HW % 128 == 0, "spatial extent must map to whole lane tiles"

    # Batch tile: big enough to amortize per-step overhead, but keep grid >= 2 when
    # N >= 2 so both v7x TensorCores get work ("parallel" batch axis).
    b_tile = int(max(1, min(b_tile, N)))
    if N >= 2:
        b_tile = max(1, min(b_tile, N // 2))
    n_blocks = -(-N // b_tile)
    n_pad = n_blocks * b_tile

    x = x_nchw
    if n_pad != N:
        x = jnp.concatenate([x, jnp.zeros((n_pad - N, Cin, H, W), x.dtype)], axis=0)

    # Channel-major, batch packed on the lane axis, bf16 (MXU input dtype).
    x_cm = jnp.transpose(x, (1, 0, 2, 3)).reshape(Cin, n_pad * HW).astype(jnp.bfloat16)

    c1 = kp["w1"].shape[0]
    c2 = kp["w2"].shape[0]
    nh = kp["bfc1"].shape[1]
    npad = kp["wfc2"].shape[1]

    flops = n_pad * 2 * (9 * Cin * c1 * HW + 9 * c1 * c2 * HW
                         + c2 * HW * 49 + c2 * 49 * nh + nh * npad)
    w_bytes = sum(int(np.prod(v.shape)) * v.dtype.itemsize for v in kp.values())
    cost = pl.CostEstimate(flops=int(flops), transcendentals=0,
                           bytes_accessed=int(x_cm.size * 2 + w_bytes + n_pad * npad * 4))

    kernel = functools.partial(_fused_cnn_kernel, H=H, W=W, b_tile=b_tile,
                               roll_like_jnp=roll_like_jnp)
    out = pl.pallas_call(
        kernel,
        out_shape=jax.ShapeDtypeStruct((n_blocks, b_tile, npad), jnp.float32),
        grid=(n_blocks,),
        in_specs=[
            pl.BlockSpec((Cin, b_tile * HW), lambda n: (0, n)),   # x: B_TILE images / step
            pl.BlockSpec((c1, 9 * Cin), lambda n: (0, 0)),        # conv1 weight (bf16)
            pl.BlockSpec((c1, 1), lambda n: (0, 0)),              # conv1 bias   (f32)
            pl.BlockSpec((c2, 9 * c1), lambda n: (0, 0)),         # conv2 weight (bf16)
            pl.BlockSpec((c2, 1), lambda n: (0, 0)),              # conv2 bias   (f32)
            pl.BlockSpec((HW, 49), lambda n: (0, 0)),             # pool matrix  (bf16)
            pl.BlockSpec((c2, 49, nh), lambda n: (0, 0, 0)),      # fc1 weight   (bf16)
            pl.BlockSpec((1, nh), lambda n: (0, 0)),              # fc1 bias     (f32)
            pl.BlockSpec((nh, npad), lambda n: (0, 0)),           # fc2 weight, lane-padded
            pl.BlockSpec((1, npad), lambda n: (0, 0)),            # fc2 bias, lane-padded
        ],
        out_specs=pl.BlockSpec((1, b_tile, npad), lambda n: (n, 0, 0)),
        compiler_params=pltpu.CompilerParams(
            dimension_semantics=("parallel",)),                   # batch tiles across TCs
        cost_estimate=cost,
    )(x_cm, kp["w1"], kp["b1"], kp["w2"], kp["b2"], kp["pool"],
      kp["wfc1"], kp["bfc1"], kp["wfc2"], kp["bfc2"])

    return out.reshape(n_pad, npad)[:N, :action_dim]


# ---------------------------------------------------------------------------
# Parameters in native PyTorch layouts + explicit converter to kernel layouts.
# ---------------------------------------------------------------------------
def make_torch_style_params(key, input_channels, action_dim):
    """convN_w: (Cout, Cin, 3, 3); convN_b: (Cout,); fcN_w: (out, in); fcN_b: (out,)."""
    ks = jax.random.split(key, 8)
    n = lambda k, shape, s: s * jax.random.normal(k, shape, jnp.float32)
    return {
        "conv1_w": n(ks[0], (16, input_channels, 3, 3), 0.15),
        "conv1_b": n(ks[1], (16,), 0.05),
        "conv2_w": n(ks[2], (32, 16, 3, 3), 0.15),
        "conv2_b": n(ks[3], (32,), 0.05),
        "fc1_w":   n(ks[4], (256, 32 * 7 * 7), 0.05),
        "fc1_b":   n(ks[5], (256,), 0.05),
        "fc2_w":   n(ks[6], (action_dim, 256), 0.1),
        "fc2_b":   n(ks[7], (action_dim,), 0.05),
    }


def convert_params_for_kernel(p, H, W, out_lane_pad=128):
    """PyTorch layouts -> kernel layouts (documented so real checkpoints port safely):
       conv w (Cout,Cin,3,3) -> (Cout, 9*Cin), contraction index = (kh*3+kw)*Cin + cin (bf16)
       fc1  w (256, 32*7*7)  -> (32, 49, 256), ordered [c][p=i*7+j][out]               (bf16)
       fc2  w (A, 256)       -> (256, 128) zero-padded on the lane dim                 (bf16)
       biases stay f32 (epilogues accumulate in f32); pool matrix is bf16 (MXU input)."""
    def conv_flat(w):
        cout, cin = w.shape[0], w.shape[1]
        return jnp.transpose(w, (0, 2, 3, 1)).reshape(cout, 9 * cin).astype(jnp.bfloat16)

    c2 = p["conv2_w"].shape[0]
    nh = p["fc1_w"].shape[0]
    adim = p["fc2_w"].shape[0]
    npad = max(out_lane_pad, adim)

    wfc2 = jnp.zeros((nh, npad), jnp.float32).at[:, :adim].set(p["fc2_w"].T)
    bfc2 = jnp.zeros((1, npad), jnp.float32).at[0, :adim].set(p["fc2_b"])

    return {
        "w1": conv_flat(p["conv1_w"]),
        "b1": p["conv1_b"].reshape(-1, 1).astype(jnp.float32),
        "w2": conv_flat(p["conv2_w"]),
        "b2": p["conv2_b"].reshape(-1, 1).astype(jnp.float32),
        "pool": jnp.asarray(adaptive_pool_matrix(H, W, 7, 7)).astype(jnp.bfloat16),
        "wfc1": p["fc1_w"].T.reshape(c2, 49, nh).astype(jnp.bfloat16),   # (32, 49, 256)
        "bfc1": p["fc1_b"].reshape(1, -1).astype(jnp.float32),
        "wfc2": wfc2.astype(jnp.bfloat16),
        "bfc2": bfc2,
    }


# ---------------------------------------------------------------------------
# Pure-JAX f32 reference (same math as the PyTorch module) for a tolerance check.
# ---------------------------------------------------------------------------
def reference_forward(x_nchw, p):
    dn = ("NCHW", "OIHW", "NCHW")
    y = jax.lax.conv_general_dilated(x_nchw, p["conv1_w"], (1, 1), "SAME",
                                     dimension_numbers=dn)
    y = jax.nn.relu(y + p["conv1_b"][None, :, None, None])
    y = jax.lax.conv_general_dilated(y, p["conv2_w"], (1, 1), "SAME",
                                     dimension_numbers=dn)
    y = jax.nn.relu(y + p["conv2_b"][None, :, None, None])
    N, C, H, W = y.shape
    P = jnp.asarray(adaptive_pool_matrix(H, W, 7, 7))
    pooled = jnp.einsum("ncs,sp->ncp", y.reshape(N, C, H * W), P)
    flat = pooled.reshape(N, C * 49)                       # == torch.flatten(x, 1) on NCHW
    h = jax.nn.relu(flat @ p["fc1_w"].T + p["fc1_b"])
    return h @ p["fc2_w"].T + p["fc2_b"]


if __name__ == "__main__":
    batch, input_channels, H, W = 8, 4, 16, 16
    action_dim = 6

    root = jax.random.PRNGKey(0)
    k_params, k_x = jax.random.split(root)
    tparams = make_torch_style_params(k_params, input_channels, action_dim)
    x = jax.random.normal(k_x, (batch, input_channels, H, W), jnp.float32)

    roll_ok = _roll_matches_jnp()                 # one-time device probe (init only)
    kparams = convert_params_for_kernel(tparams, H, W)

    # b_tile=4 -> grid of 2 steps (both v7x TensorCores busy) with 4 images per step.
    fwd = jax.jit(functools.partial(cnn_forward, action_dim=action_dim,
                                    b_tile=4, roll_like_jnp=roll_ok))
    out = jax.block_until_ready(fwd(x, kparams))
    assert out.shape == (batch, action_dim), out.shape

    ref = reference_forward(x, tparams)           # f32 reference; kernel uses bf16 MXU inputs
    np.testing.assert_allclose(np.asarray(out), np.asarray(ref), rtol=0.1, atol=0.1)
    print("KERNEL_OK")
</pallas_src>

<mosaic_0001>
module attributes {stable_mosaic.version = 11 : i64} {
  func.func @_roll_probe_kernel(%arg0: memref<8x128xi32, #tpu.memory_space<vmem>>, %arg1: memref<8x128xi32, #tpu.memory_space<vmem>>) attributes {dimension_semantics = [], scalar_prefetch = 0 : i64, scratch_operands = 0 : i64, tpu.core_type = #tpu.core_type<tc>} {
    %c0 = arith.constant 0 : index
    %c0_0 = arith.constant 0 : index
    %0 = vector.load %arg0[%c0, %c0_0] : memref<8x128xi32, #tpu.memory_space<vmem>>, vector<8x128xi32>
    %c1_i32 = arith.constant 1 : i32
    %1 = tpu.dynamic_rotate %0 by %c1_i32 dim 1 : vector<8x128xi32>, i32 -> vector<8x128xi32>
    %c0_1 = arith.constant 0 : index
    %c0_2 = arith.constant 0 : index
    %2 = vector.load %arg1[%c0_1, %c0_2] : memref<8x128xi32, #tpu.memory_space<vmem>>, vector<8x128xi32>
    tpu.vector_store %arg1[%c0_1, %c0_2], %1 {strides = array<i32>} : memref<8x128xi32, #tpu.memory_space<vmem>>, vector<8x128xi32>,
    return
  }
}

</mosaic_0001>

<llo_original>
// kernel: tpu_custom_call.1
$region0: #{tpu_custom_call.1}
  #allocation0 [shape = 'u32[]', space=smem, size = 0x4, offset = 0x4, fixed_abs, tag = 'smem constant byte address 0x4 - core index']
  #allocation1 [shape = 'u32[144,128]{1,0:T(1,128)}', space=vmem, size = 0x12000, scoped, tag = 'internal scratch']
  %s0 = inlined_call_operand.hbm [shape: s32[8,128], index: 0, kind: input, shape index: {}]
  %s1 = inlined_call_operand.hbm [shape: s32[8,128], index: 1, kind: output, shape index: {}]
  %s2 = sld [smem:[#allocation0]]
  $region18: #{tpu_custom_call.1} parent=0
    _
  %s4 = ssub.s32 1, %s2
  %s5 = scalar_select 0, %s4, %s2
  $region1: #{tpu_custom_call.1} parent=0
    #allocation2 [shape = 'u8[4096]{0}', space=vmem, size = 0x1000, scoped, tag = 'input window, operand 0, single buffered']
    #allocation3 [shape = 's32[1]{0}', space=sflag, size = 0x4, scoped, tag = 'scoped memory for tpu_custom_call.1']
    #allocation4 [shape = 's32[1]{0}', space=sflag, size = 0x4, scoped, tag = 'scoped memory for tpu_custom_call.1']
    #allocation5 [shape = 'u8[4096]{0}', space=vmem, size = 0x1000, scoped, tag = 'output window, operand 0, single buffered']
    %6 = vsyncpa [#allocation3], 0
    %7 = vsyncpa [#allocation4], 0
    // Predicated region
    $region2: #{tpu_custom_call.1} parent=1 // pred_check
      _
    $region3: #{tpu_custom_call.1} parent=1 // pred_check_branch
      %9 = sbr.rel (0) target = $region5
    $region4: #{tpu_custom_call.1} parent=1 // pred_region
      %s11 = ssub.s32 128, 128
      %12 = vsyncadd [#allocation3], %s11
      %s14 = sshll.u32 [#allocation2], 4
      %s15 = int_to_ptr.vmem [resolvable:$true] %s14
      %17 = dma.hbm_to_vmem [thread:$0]  %s0, 128, %s15, [#allocation3]
    $region5: #{tpu_custom_call.1} parent=1 // pred_fallthru
      _
    // Predicated region
    $region6: #{tpu_custom_call.1} parent=1 // pred_check
      _
    $region7: #{tpu_custom_call.1} parent=1 // pred_check_branch
      %19 = sbr.rel (0) target = $region9
    $region8: #{tpu_custom_call.1} parent=1 // pred_region
      %20 = dma.done [#allocation3], 128
    $region9: #{tpu_custom_call.1} parent=1 // pred_fallthru
      _
    %v21 = vld [vmem:[#allocation2] sm:$0xff]
    %22 = vrot.lane.b32.xlu0 %v21, 1
    %v23 = vpop.permute.xlu0 %22
    %24 = vst [vmem:[#allocation5] sm:$0xff] %v23
    // Predicated region
    $region10: #{tpu_custom_call.1} parent=1 // pred_check
      _
    $region11: #{tpu_custom_call.1} parent=1 // pred_check_branch
      %26 = sbr.rel (0) target = $region13
    $region12: #{tpu_custom_call.1} parent=1 // pred_region
      %s28 = ssub.s32 128, 128
      %29 = vsyncadd [#allocation4], %s28
      %s31 = sshll.u32 [#allocation5], 4
      %s32 = int_to_ptr.vmem [resolvable:$true] %s31
      %34 = dma.vmem_to_hbm [thread:$0]  %s32, 128, %s1, [#allocation4]
    $region13: #{tpu_custom_call.1} parent=1 // pred_fallthru
      _
    // Predicated region
    $region14: #{tpu_custom_call.1} parent=1 // pred_check
      _
    $region15: #{tpu_custom_call.1} parent=1 // pred_check_branch
      %36 = sbr.rel (0) target = $region17
    $region16: #{tpu_custom_call.1} parent=1 // pred_region
      %37 = dma.done [#allocation4], 128
    $region17: #{tpu_custom_call.1} parent=1 // pred_fallthru
      _
    %38 = vsyncpa [#allocation3], 1
    %39 = vsyncpa [#allocation4], 1

</llo_original>
